<compile_context>
chip_gen: v6e
topology: v6e:2x2x1
jax: 0.10.0
libtpu: 0.0.40
codegen_flags: <defaults>
</compile_context>

<pallas_src>
import numpy as np
import jax
import jax.numpy as jnp
from jax.experimental import pallas as pl
from jax.experimental.pallas import tpu as pltpu


# ---------------------------------------------------------------------------
# Pallas kernels (pure elementwise pass over x with per-row broadcast vectors)
# ---------------------------------------------------------------------------
def _fwa_add_kernel(shift_ref, x_ref, o_ref):
    """out = x + shift   (shift: (TR, 1) per-row, broadcast over lanes)."""
    o_ref[...] = x_ref[...] + shift_ref[...]


def _fwa_affine_kernel(scale_ref, shift_ref, x_ref, o_ref):
    """out = scale * x + shift   with scale = 1 + gamma, shift = beta."""
    o_ref[...] = scale_ref[...] * x_ref[...] + shift_ref[...]


# ---------------------------------------------------------------------------
# Tile selection
# ---------------------------------------------------------------------------
def _choose_tiles(n_rows, hw, bytes_per_elem=4,
                  max_block_bytes=4 * 1024 * 1024, min_grid_blocks=4):
    """Pick (row_tile, lane_tile) for a (n_rows, hw) array.

    * lane tile: multiple of 128 (or full extent when hw <= 128); the grid uses
      cdiv so a partial tail block is legal.
    * row tile: multiple of 8 (or full extent when n_rows <= 8).
    * block capped at ~4 MiB (amortizes the ~0.35 us per-step overhead on
      v7x/v6e; safe on v5e because vmem_limit_bytes is raised accordingly).
    * growth stops if it would leave fewer than `min_grid_blocks` blocks,
      so both v7x TensorCores stay fed on small batch / small HW shapes.
    """
    r0 = n_rows if n_rows <= 8 else 8
    t0 = hw if hw <= 128 else 128

    def n_blocks(tr, t):
        return pl.cdiv(n_rows, tr) * pl.cdiv(hw, t)

    target_blocks = min(min_grid_blocks, n_blocks(r0, t0))

    # Grow the lane tile first (contiguous HBM chunks), then the row tile.
    t = t0
    hw_padded = pl.cdiv(hw, 128) * 128 if hw > 128 else hw
    while (hw > 128 and t * 2 <= hw_padded
           and r0 * (t * 2) * bytes_per_elem <= max_block_bytes
           and n_blocks(r0, t * 2) >= target_blocks):
        t *= 2

    tr = r0
    rows_padded = pl.cdiv(n_rows, 8) * 8 if n_rows > 8 else n_rows
    while (n_rows > 8 and tr * 2 <= rows_padded
           and (tr * 2) * t * bytes_per_elem <= max_block_bytes
           and n_blocks(tr * 2, t) >= target_blocks):
        tr *= 2

    return tr, t


# ---------------------------------------------------------------------------
# Wrapper
# ---------------------------------------------------------------------------
def feature_wise_affine(x, noise_embed, weight, bias, use_affine_level=False,
                        donate_x=False):
    """Pallas implementation of FeatureWiseAffine.forward.

    x           : (B, C, H, W) float32   (PyTorch NCHW)
    noise_embed : (B, Din)     float32
    weight      : (Dout, Din)  float32   PyTorch nn.Linear weight (Dout = C or 2C)
    bias        : (Dout,)      float32
    donate_x    : set True only when the caller donates x's buffer; then the
                  output aliases x's HBM allocation (no extra allocation).
    """
    B, C, H, W = x.shape
    HW = H * W
    R = B * C
    bpe = jnp.dtype(x.dtype).itemsize

    # ---- tiny projection: proj = noise_embed @ weight.T + bias  (B x Dout) --
    # Done in plain JAX (a few KB / ~B*Dout*Din flops); the fusion that matters
    # is the single pass over x below, not these few flops.
    proj = (jnp.einsum("bd,od->bo", noise_embed.astype(jnp.float32),
                       weight.astype(jnp.float32),
                       precision=jax.lax.Precision.HIGHEST)
            + bias.astype(jnp.float32))

    x2 = x.reshape(R, HW)                      # free reshape, lane-dense layout

    TR, T = _choose_tiles(R, HW, bytes_per_elem=bpe)
    grid = (pl.cdiv(R, TR), pl.cdiv(HW, T))

    x_spec = pl.BlockSpec((TR, T), lambda r, s: (r, s))
    vec_spec = pl.BlockSpec((TR, 1), lambda r, s: (r, 0))

    block_bytes = TR * T * bpe
    # pipeline holds ~2x input + 2x output blocks (+ tiny per-row vectors)
    vmem_limit = int(min(40 << 20, max(16 << 20, 4 * block_bytes + (2 << 20))))
    cparams = pltpu.CompilerParams(
        dimension_semantics=("parallel", "parallel"),
        vmem_limit_bytes=vmem_limit)

    total_bytes = R * HW * bpe
    cost = pl.CostEstimate(flops=2 * R * HW, transcendentals=0,
                           bytes_accessed=2 * total_bytes)

    if use_affine_level:
        # torch.chunk(2, dim=1): gamma = proj[:, :C], beta = proj[:, C:]
        gamma = proj[:, :C].reshape(R, 1)
        beta = proj[:, C:2 * C].reshape(R, 1)
        scale = (1.0 + gamma).astype(x2.dtype)
        shift = beta.astype(x2.dtype)
        kernel = _fwa_affine_kernel
        operands = (scale, shift, x2)
        in_specs = [vec_spec, vec_spec, x_spec]
        x_index = 2
    else:
        shift = proj.reshape(R, 1).astype(x2.dtype)
        kernel = _fwa_add_kernel
        operands = (shift, x2)
        in_specs = [vec_spec, x_spec]
        x_index = 1

    io_aliases = {x_index: 0} if donate_x else {}

    out2 = pl.pallas_call(
        kernel,
        out_shape=jax.ShapeDtypeStruct((R, HW), x2.dtype),
        grid=grid,
        in_specs=in_specs,
        out_specs=x_spec,
        compiler_params=cparams,
        cost_estimate=cost,
        input_output_aliases=io_aliases,
    )(*operands)

    return out2.reshape(B, C, H, W)


# ---------------------------------------------------------------------------
# Pure-JAX reference (for verification)
# ---------------------------------------------------------------------------
def ref_forward(x, noise_embed, weight, bias, use_affine_level):
    B, C, H, W = x.shape
    proj = jnp.einsum("bd,od->bo", noise_embed, weight,
                      precision=jax.lax.Precision.HIGHEST) + bias
    if use_affine_level:
        gamma = proj[:, :C].reshape(B, C, 1, 1)
        beta = proj[:, C:].reshape(B, C, 1, 1)
        return (1.0 + gamma) * x + beta
    return x + proj.reshape(B, C, 1, 1)


# ---------------------------------------------------------------------------
if __name__ == "__main__":
    key = jax.random.PRNGKey(0)
    k_x, k_n, k_w1, k_b1, k_w2, k_b2 = jax.random.split(key, 6)

    B, C, H, W = 2, 4, 16, 16          # x shape (NCHW)
    Din = 32                           # noise-embedding width (Linear in_channels)

    x = jax.random.normal(k_x, (B, C, H, W), jnp.float32)
    noise_embed = jax.random.normal(k_n, (B, Din), jnp.float32)

    bound = 1.0 / float(np.sqrt(Din))
    # use_affine_level = False : Linear(Din -> C)
    w_add = jax.random.uniform(k_w1, (C, Din), jnp.float32, -bound, bound)
    b_add = jax.random.uniform(k_b1, (C,), jnp.float32, -bound, bound)
    # use_affine_level = True  : Linear(Din -> 2C)
    w_aff = jax.random.uniform(k_w2, (2 * C, Din), jnp.float32, -bound, bound)
    b_aff = jax.random.uniform(k_b2, (2 * C,), jnp.float32, -bound, bound)

    out_add = feature_wise_affine(x, noise_embed, w_add, b_add,
                                  use_affine_level=False)
    out_aff = feature_wise_affine(x, noise_embed, w_aff, b_aff,
                                  use_affine_level=True)
    out_add, out_aff = jax.block_until_ready((out_add, out_aff))

    ref_add = ref_forward(x, noise_embed, w_add, b_add, False)
    ref_aff = ref_forward(x, noise_embed, w_aff, b_aff, True)

    np.testing.assert_allclose(np.asarray(out_add), np.asarray(ref_add),
                               atol=1e-5, rtol=1e-5)
    np.testing.assert_allclose(np.asarray(out_aff), np.asarray(ref_aff),
                               atol=1e-5, rtol=1e-5)
    print("KERNEL_OK")
</pallas_src>

<mosaic_0001>
module attributes {stable_mosaic.version = 11 : i64} {
  func.func @_fwa_add_kernel(%arg0: i32, %arg1: i32, %arg2: memref<8x1xf32, #tpu.memory_space<vmem>>, %arg3: memref<8x128xf32, #tpu.memory_space<vmem>>, %arg4: memref<8x128xf32, #tpu.memory_space<vmem>>) attributes {dimension_semantics = [#tpu.dimension_semantics<parallel>, #tpu.dimension_semantics<parallel>], iteration_bounds = array<i64: 1, 2>, scalar_prefetch = 0 : i64, scratch_operands = 0 : i64, tpu.core_type = #tpu.core_type<tc>, window_params = [{transform_indices = @transform_0, window_bounds = array<i64: 8, 1>}, {transform_indices = @transform_1, window_bounds = array<i64: 8, 128>}, {transform_indices = @transform_2, window_bounds = array<i64: 8, 128>}]} {
    %c0 = arith.constant 0 : index
    %c0_0 = arith.constant 0 : index
    %0 = vector.load %arg3[%c0, %c0_0] : memref<8x128xf32, #tpu.memory_space<vmem>>, vector<8x128xf32>
    %c0_1 = arith.constant 0 : index
    %c0_2 = arith.constant 0 : index
    %1 = vector.load %arg2[%c0_1, %c0_2] : memref<8x1xf32, #tpu.memory_space<vmem>>, vector<8x1xf32>
    %2 = vector.broadcast %1 : vector<8x1xf32> to vector<8x128xf32>
    %3 = arith.addf %0, %2 : vector<8x128xf32>
    %c0_3 = arith.constant 0 : index
    %c0_4 = arith.constant 0 : index
    %4 = vector.load %arg4[%c0_3, %c0_4] : memref<8x128xf32, #tpu.memory_space<vmem>>, vector<8x128xf32>
    tpu.vector_store %arg4[%c0_3, %c0_4], %3 {strides = array<i32>} : memref<8x128xf32, #tpu.memory_space<vmem>>, vector<8x128xf32>,
    return
  }
  func.func @transform_0(%arg0: i32, %arg1: i32) -> (i32, i32) {
    %c0_i32 = arith.constant 0 : i32
    %c0_i32_0 = arith.constant 0 : i32
    return %arg0, %c0_i32 : i32, i32
  }
  func.func @transform_1(%arg0: i32, %arg1: i32) -> (i32, i32) {
    %c0_i32 = arith.constant 0 : i32
    return %arg0, %arg1 : i32, i32
  }
  func.func @transform_2(%arg0: i32, %arg1: i32) -> (i32, i32) {
    %c0_i32 = arith.constant 0 : i32
    return %arg0, %arg1 : i32, i32
  }
}

</mosaic_0001>

<llo_original>
// kernel: tpu_custom_call.1
$region0: #{tpu_custom_call.1}
  #allocation0 [shape = 'u32[]', space=smem, size = 0x4, offset = 0x4, fixed_abs, tag = 'smem constant byte address 0x4 - core index']
  #allocation1 [shape = 'u32[144,128]{1,0:T(1,128)}', space=vmem, size = 0x12000, scoped, tag = 'internal scratch']
  %s0 = inlined_call_operand.vmem [shape: f32[8,1], index: 0, kind: input, shape index: {}]
  %s1 = inlined_call_operand.hbm [shape: f32[8,256], index: 1, kind: input, shape index: {}]
  %s2 = inlined_call_operand.hbm [shape: f32[8,256], index: 2, kind: output, shape index: {}]
  %s3 = sld [smem:[#allocation0]]
  $region45: #{tpu_custom_call.1} parent=0
    _
  %s5 = ssub.s32 1, %s3
  %s6 = scalar_select 0, %s5, %s3
  $region1: #{tpu_custom_call.1} parent=0
    #allocation2 [shape = 'u8[8192]{0}', space=vmem, size = 0x2000, scoped, tag = 'input window, operand 1']
    #allocation3 [shape = 's32[2]{0}', space=sflag, size = 0x8, scoped, tag = 'scoped memory for tpu_custom_call.1']
    #allocation4 [shape = 's32[2]{0}', space=sflag, size = 0x8, scoped, tag = 'scoped memory for tpu_custom_call.1']
    #allocation5 [shape = 'u8[8192]{0}', space=vmem, size = 0x2000, scoped, tag = 'output window, operand 0']
    %7 = vsyncpa [#allocation3], 0
    %s8 = scalar_lea.sflag [#allocation3], 1
    %9 = vsyncpa %s8, 0
    %10 = vsyncpa [#allocation4], 0
    %s11 = scalar_lea.sflag [#allocation4], 1
    %12 = vsyncpa %s11, 0
    loop: start=0, step=1, limit=4
    $region2: #{tpu_custom_call.1} parent=1 // loop_pre_header
      _
    $region3: #{tpu_custom_call.1} parent=1 // loop_header
      %s14 = sphi 0, %s18
      %p15 = scmp.ge.s32.totalorder %s14, 4
      %s21 = sphi 0, %s33
      %s22 = sphi 0, %s29
      %s23 = sphi 0, %s21
      %s24 = sphi 0, %s22
      %s25 = sphi 0, %s23
      %s26 = sphi 0, %s24
      %s36 = sphi 0, %s38
      %s39 = sphi 0, %s36
      %s40 = sphi 0, %s39
      %s56 = sphi 0, %s40
      %s64 = sphi 0, %s66
      %s67 = sphi 0, %s64
      %s68 = sphi 0, %s67
      %s84 = sphi 0, %s68
      %s92 = sphi 0, %s94
      %s95 = sphi 0, %s92
      %s96 = sphi 0, %s95
      %s112 = sphi 0, %s96
    $region4: #{tpu_custom_call.1} parent=1 // loop_header_branch
      %17 = sbr.rel (%p15) target = $region8
    $region5: #{tpu_custom_call.1} parent=1 // loop_body
      %s19 = ssub.s32 %s14, 1
      %s20 = ssub.s32 %s14, 2
      %s27 = sadd.s32 1, %s22
      %p28 = scmp.ge.s32.totalorder %s27, 2
      %s29 = scalar_select %p28, 0, %s27
      %s30 = sadd.s32 1, %s21
      %s31 = scalar_select %p28, %s30, %s21
      %p32 = scmp.ge.s32.totalorder %s31, 1
      %s33 = scalar_select %p32, 0, %s31
      %s34 = ssub.s32 %s21, %s33
      %p35 = scmp.eq.s32.totalorder %s34, 0
      %s37 = sadd.s32 %s36, 1
      %s38 = scalar_select %p35, %s36, %s37
      %p41 = pneg %p35
      %p42 = scmp.eq.s32.totalorder %s14, 1
      %p43 = por %p41, %p42
      %p44 = scmp.ne.s32.totalorder %s36, %s39
      %p45 = scmp.eq.s32.totalorder %s14, 0
      %p46 = por %p44, %p45
      %p47 = scmp.ne.s32.totalorder %s36, %s39
      %p48 = scmp.eq.s32.totalorder %s19, 1
      %p49 = por %p47, %p48
      %p50 = scmp.ne.s32.totalorder %s39, %s40
      %p51 = scmp.eq.s32.totalorder %s19, 0
      %p52 = por %p50, %p51
      %p53 = scmp.ne.s32.totalorder %s39, %s40
      %p54 = scmp.eq.s32.totalorder %s20, 1
      %p55 = por %p53, %p54
      %p57 = scmp.ne.s32.totalorder %s40, %s56
      %p58 = scmp.eq.s32.totalorder %s20, 0
      %p59 = por %p57, %p58
      %s60 = ssub.s32 %s21, %s33
      %s61 = ssub.s32 %s22, %s29
      %s62 = sor.u32 %s60, %s61
      %p63 = scmp.eq.s32.totalorder %s62, 0
      %s65 = sadd.s32 %s64, 1
      %s66 = scalar_select %p63, %s64, %s65
      %p69 = pneg %p63
      %p70 = scmp.eq.s32.totalorder %s14, 1
      %p71 = por %p69, %p70
      %p72 = scmp.ne.s32.totalorder %s64, %s67
      %p73 = scmp.eq.s32.totalorder %s14, 0
      %p74 = por %p72, %p73
      %p75 = scmp.ne.s32.totalorder %s64, %s67
      %p76 = scmp.eq.s32.totalorder %s19, 1
      %p77 = por %p75, %p76
      %p78 = scmp.ne.s32.totalorder %s67, %s68
      %p79 = scmp.eq.s32.totalorder %s19, 0
      %p80 = por %p78, %p79
      %p81 = scmp.ne.s32.totalorder %s67, %s68
      %p82 = scmp.eq.s32.totalorder %s20, 1
      %p83 = por %p81, %p82
      %p85 = scmp.ne.s32.totalorder %s68, %s84
      %p86 = scmp.eq.s32.totalorder %s20, 0
      %p87 = por %p85, %p86
      %s88 = ssub.s32 %s21, %s33
      %s89 = ssub.s32 %s22, %s29
      %s90 = sor.u32 %s88, %s89
      %p91 = scmp.eq.s32.totalorder %s90, 0
      %s93 = sadd.s32 %s92, 1
      %s94 = scalar_select %p91, %s92, %s93
      %p97 = pneg %p91
      %p98 = scmp.eq.s32.totalorder %s14, 1
      %p99 = por %p97, %p98
      %p100 = scmp.ne.s32.totalorder %s92, %s95
      %p101 = scmp.eq.s32.totalorder %s14, 0
      %p102 = por %p100, %p101
      %p103 = scmp.ne.s32.totalorder %s92, %s95
      %p104 = scmp.eq.s32.totalorder %s19, 1
      %p105 = por %p103, %p104
      %p106 = scmp.ne.s32.totalorder %s95, %s96
      %p107 = scmp.eq.s32.totalorder %s19, 0
      %p108 = por %p106, %p107
      %p109 = scmp.ne.s32.totalorder %s95, %s96
      %p110 = scmp.eq.s32.totalorder %s20, 1
      %p111 = por %p109, %p110
      %p113 = scmp.ne.s32.totalorder %s96, %s112
      %p114 = scmp.eq.s32.totalorder %s20, 0
      %p115 = por %p113, %p114
      %p116 = scmp.le.s32.totalorder 1, %s14
      %p117 = scmp.lt.s32.totalorder %s14, 3
      %p118 = pnand %p116, %p117
      %p119 = pneg %p118
      // Predicated region
      $region9: #{tpu_custom_call.1} parent=5 // pred_check
        _
      $region10: #{tpu_custom_call.1} parent=5 // pred_check_branch
        %121 = sbr.rel (%p118) target = $region12
      $region11: #{tpu_custom_call.1} parent=5 // pred_region
        %s122 = ssub.s32 %s14, 1
        // Predicated region
        $region13: #{tpu_custom_call.1} parent=11 // pred_check
          %p123 = pneg %p52
        $region14: #{tpu_custom_call.1} parent=11 // pred_check_branch
          %125 = sbr.rel (%p123) target = $region16
        $region15: #{tpu_custom_call.1} parent=11 // pred_region
          %p126 = scmp.lt.s32.totalorder %s23, 0
          %s127 = scalar_select %p126, %s23, 0
          %s128 = smul.addr %s127, 8
          %s129 = scalar_lea.vmem %s0, %s128
        $region16: #{tpu_custom_call.1} parent=11 // pred_fallthru
          _
      $region12: #{tpu_custom_call.1} parent=5 // pred_fallthru
        _
      %p130 = scmp.lt.s32.totalorder %s14, 2
      // Predicated region
      $region17: #{tpu_custom_call.1} parent=5 // pred_check
        %p131 = pneg %p130
      $region18: #{tpu_custom_call.1} parent=5 // pred_check_branch
        %133 = sbr.rel (%p131) target = $region20
      $region19: #{tpu_custom_call.1} parent=5 // pred_region
        // Predicated region
        $region21: #{tpu_custom_call.1} parent=19 // pred_check
          %p134 = pneg %p74
        $region22: #{tpu_custom_call.1} parent=19 // pred_check_branch
          %136 = sbr.rel (%p134) target = $region24
        $region23: #{tpu_custom_call.1} parent=19 // pred_region
          %s137 = sand.u32 %s64, 1
          %s138 = scalar_lea.sflag [#allocation3], %s137
          %s139 = sand.u32 %s64, 1
          %s140 = smul.addr %s139, 8
          %s141 = scalar_lea.vmem [#allocation2], %s140
          %s143 = ssub.s32 128, 128
          %144 = vsyncadd %s138, %s143
          %s145 = smul.addr %s21, 2
          %s146 = sadd.s32 %s22, %s145
          %s147 = smul.addr %s146, 128
          %s148 = scalar_lea.hbm %s1, %s147
          %s150 = sshll.u32 %s141, 4
          %s151 = int_to_ptr.vmem [resolvable:$true] %s150
          %153 = dma.hbm_to_vmem [thread:$0]  %s148, 128, %s151, %s138
        $region24: #{tpu_custom_call.1} parent=19 // pred_fallthru
          _
      $region20: #{tpu_custom_call.1} parent=5 // pred_fallthru
        _
      %p154 = scmp.le.s32.totalorder 1, %s14
      %p155 = scmp.lt.s32.totalorder %s14, 3
      %p156 = pnand %p154, %p155
      %p157 = pneg %p156
      // Predicated region
      $region25: #{tpu_custom_call.1} parent=5 // pred_check
        _
      $region26: #{tpu_custom_call.1} parent=5 // pred_check_branch
        %159 = sbr.rel (%p156) target = $region28
      $region27: #{tpu_custom_call.1} parent=5 // pred_region
        %s160 = ssub.s32 %s14, 1
        %s161 = sand.u32 %s67, 1
        %s162 = scalar_lea.sflag [#allocation3], %s161
        %s163 = sand.u32 %s67, 1
        %s164 = smul.addr %s163, 8
        %s165 = scalar_lea.vmem [#allocation2], %s164
        // Predicated region
        $region29: #{tpu_custom_call.1} parent=27 // pred_check
          %p166 = pneg %p80
        $region30: #{tpu_custom_call.1} parent=27 // pred_check_branch
          %168 = sbr.rel (%p166) target = $region32
        $region31: #{tpu_custom_call.1} parent=27 // pred_region
          %169 = dma.done %s162, 128
        $region32: #{tpu_custom_call.1} parent=27 // pred_fallthru
          _
        %p170 = scmp.lt.s32.totalorder %s23, 0
        %s171 = scalar_select %p170, %s23, 0
        %s172 = smul.addr %s171, 8
        %s173 = scalar_lea.vmem %s0, %s172
        %p174 = pneg %p52
        %p175 = pneg %p49
        %s176 = sand.u32 %s67, 1
        %s177 = scalar_lea.sflag [#allocation3], %s176
        %s178 = sand.u32 %s67, 1
        %s179 = smul.addr %s178, 8
        %s180 = scalar_lea.vmem [#allocation2], %s179
        %p181 = pneg %p80
        %p182 = pneg %p77
        %p183 = pneg %p108
        %p184 = pneg %p105
        %s185 = sand.u32 %s95, 1
        %s186 = scalar_lea.sflag [#allocation4], %s185
        %s187 = sand.u32 %s95, 1
        %s188 = smul.addr %s187, 8
        %s189 = scalar_lea.vmem [#allocation5], %s188
        %p190 = scmp.lt.s32.totalorder %s23, 0
        %s191 = scalar_select %p190, %s23, 0
        %s192 = smul.addr %s191, 8
        %s193 = scalar_lea.vmem %s0, %s192
        %v194 = vld [vmem:[%s165] sm:$0xff]
        %v195 = vld [vmem:[%s193] sm:$0xff]
        %197 = vset.pattern.permute.xlu0 0
        %198 = vperm.xlu0 %197, %v195
        %v199 = vpop.permute.xlu0 %198
        %v201 = vadd.f32 %v194, %v199
        %202 = vst [vmem:[%s189] sm:$0xff] %v201
        %s203 = sand.u32 %s95, 1
        %s204 = scalar_lea.sflag [#allocation4], %s203
        %s205 = sand.u32 %s95, 1
        %s206 = smul.addr %s205, 8
        %s207 = scalar_lea.vmem [#allocation5], %s206
        // Predicated region
        $region33: #{tpu_custom_call.1} parent=27 // pred_check
          %p208 = pneg %p105
        $region34: #{tpu_custom_call.1} parent=27 // pred_check_branch
          %210 = sbr.rel (%p208) target = $region36
        $region35: #{tpu_custom_call.1} parent=27 // pred_region
          %s212 = ssub.s32 128, 128
          %213 = vsyncadd %s204, %s212
          %s214 = smul.addr %s23, 2
          %s215 = sadd.s32 %s24, %s214
          %s216 = smul.addr %s215, 128
          %s217 = scalar_lea.hbm %s2, %s216
          %s219 = sshll.u32 %s207, 4
          %s220 = int_to_ptr.vmem [resolvable:$true] %s219
          %222 = dma.vmem_to_hbm [thread:$0]  %s220, 128, %s217, %s204
        $region36: #{tpu_custom_call.1} parent=27 // pred_fallthru
          _
      $region28: #{tpu_custom_call.1} parent=5 // pred_fallthru
        _
      %p223 = scmp.le.s32.totalorder 2, %s14
      // Predicated region
      $region37: #{tpu_custom_call.1} parent=5 // pred_check
        %p224 = pneg %p223
      $region38: #{tpu_custom_call.1} parent=5 // pred_check_branch
        %226 = sbr.rel (%p224) target = $region40
      $region39: #{tpu_custom_call.1} parent=5 // pred_region
        %s227 = ssub.s32 %s14, 2
        // Predicated region
        $region41: #{tpu_custom_call.1} parent=39 // pred_check
          %p228 = pneg %p111
        $region42: #{tpu_custom_call.1} parent=39 // pred_check_branch
          %230 = sbr.rel (%p228) target = $region44
        $region43: #{tpu_custom_call.1} parent=39 // pred_region
          %s231 = sand.u32 %s96, 1
          %s232 = scalar_lea.sflag [#allocation4], %s231
          %s233 = sand.u32 %s96, 1
          %s234 = smul.addr %s233, 8
          %s235 = scalar_lea.vmem [#allocation5], %s234
          %236 = dma.done %s232, 128
        $region44: #{tpu_custom_call.1} parent=39 // pred_fallthru
          _
      $region40: #{tpu_custom_call.1} parent=5 // pred_fallthru
        _
    $region6: #{tpu_custom_call.1} parent=1 // loop_footer
      %s18 = sadd.s32 1, %s14
    $region7: #{tpu_custom_call.1} parent=1 // loop_footer_branch
      %13 = sbr.rel target = $region3
    $region8: #{tpu_custom_call.1} parent=1 // loop_exit
      _
    %237 = vsyncpa [#allocation3], 1
    %s238 = scalar_lea.sflag [#allocation3], 1
    %239 = vsyncpa %s238, 1
    %240 = vsyncpa [#allocation4], 1
    %s241 = scalar_lea.sflag [#allocation4], 1
    %242 = vsyncpa %s241, 1

</llo_original>
